<compile_context>
chip_gen: v5e
topology: v5e:2x2
jax: 0.10.0
libtpu: 0.0.40
codegen_flags: <defaults>
</compile_context>

<pallas_src>
import functools

import jax
import jax.numpy as jnp
from jax.experimental import pallas as pl
from jax.experimental.pallas import tpu as pltpu


def _sense_forward_kernel(d_ref, m_ref, w_ref, fy_ref, fx_ref, o_ref, *,
                          compute_dtype):
    # d_ref : [2, 1, E, tt, Y, X]   (re/im packed)
    # m_ref : [2, 1, E, 1,  Y, X]
    # w_ref : [1, 1, tt, Y, X]
    # fy_ref: [3, Y, Y]   planes: [F_re, F_im - F_re, F_re + F_im]
    # fx_ref: [3, X, X]
    # o_ref : [2, 1, 1, tt, Y, X]
    E = d_ref.shape[2]
    TT = d_ref.shape[3]
    Y = d_ref.shape[4]
    X = d_ref.shape[5]
    dt = compute_dtype
    f32 = jnp.float32

    # ---- 1) coil expansion: accumulate over emaps (E is 1-2 in practice) ----
    s_re = d_ref[0, 0, 0] * m_ref[0, 0, 0, 0] - d_ref[1, 0, 0] * m_ref[1, 0, 0, 0]
    s_im = d_ref[0, 0, 0] * m_ref[1, 0, 0, 0] + d_ref[1, 0, 0] * m_ref[0, 0, 0, 0]
    for e in range(1, E):
        s_re = s_re + d_ref[0, 0, e] * m_ref[0, 0, e, 0] - d_ref[1, 0, e] * m_ref[1, 0, e, 0]
        s_im = s_im + d_ref[0, 0, e] * m_ref[1, 0, e, 0] + d_ref[1, 0, e] * m_ref[0, 0, e, 0]
    # s_re/s_im : [tt, Y, X]

    fx0 = fx_ref[0].astype(dt)
    fx1 = fx_ref[1].astype(dt)
    fx2 = fx_ref[2].astype(dt)
    fy0 = fy_ref[0].astype(dt)
    fy1 = fy_ref[1].astype(dt)
    fy2 = fy_ref[2].astype(dt)

    # ---- 2a) x-axis DFT: right-multiply on a flat (tt*Y, X) slab -----------
    # Gauss 3-mult complex matmul: (S_re + i S_im) @ (F_re + i F_im)
    s2_re = s_re.reshape(TT * Y, X)
    s2_im = s_im.reshape(TT * Y, X)
    k1 = jnp.dot((s2_re + s2_im).astype(dt), fx0, preferred_element_type=f32)
    k2 = jnp.dot(s2_re.astype(dt), fx1, preferred_element_type=f32)
    k3 = jnp.dot(s2_im.astype(dt), fx2, preferred_element_type=f32)
    a_re = (k1 - k3).reshape(TT, Y, X)
    a_im = (k1 + k2).reshape(TT, Y, X)

    # ---- 2b) y-axis DFT: LEFT-multiply per frame (symmetric DFT matrix,
    #          so no transposes), fused with 3) weights multiply + store -----
    for t in range(TT):
        ar = a_re[t]
        ai = a_im[t]
        q1 = jnp.dot(fy0, (ar + ai).astype(dt), preferred_element_type=f32)
        q2 = jnp.dot(fy1, ar.astype(dt), preferred_element_type=f32)
        q3 = jnp.dot(fy2, ai.astype(dt), preferred_element_type=f32)
        w = w_ref[0, 0, t]
        o_ref[0, 0, 0, t] = w * (q1 - q3)
        o_ref[1, 0, 0, t] = w * (q1 + q2)


def _dft_planes(n):
    """Symmetric ortho-normalized DFT matrix as the three Gauss-trick planes:
    [F_re, F_im - F_re, F_re + F_im], shape (3, n, n), float32."""
    k = jnp.arange(n, dtype=jnp.float32)
    ang = -2.0 * jnp.pi * jnp.outer(k, k) / n
    scale = 1.0 / jnp.sqrt(jnp.float32(n))
    f_re = jnp.cos(ang) * scale
    f_im = jnp.sin(ang) * scale
    return jnp.stack([f_re, f_im - f_re, f_re + f_im]).astype(jnp.float32)


def _pick_tt(T, E, Y, X, budget_bytes=8 << 20):
    """Largest divisor of T (<=8) whose per-step working set fits a conservative
    budget.  8 MiB keeps the double-buffered pipeline well inside v7x's 64 MiB
    VMEM (and trivially inside v5e/v6e's 128 MiB)."""
    best = 1
    for tt in range(1, min(T, 8) + 1):
        if T % tt:
            continue
        per_step = (
            # double-buffered data / weights / output tiles
            2 * (2 * E * tt + tt + 2 * tt) * Y * X * 4
            # maps tile (revisited, effectively single-buffered per (b,c))
            + 2 * E * Y * X * 4
            # f32 intermediates (s, a, matmul temps)
            + 10 * tt * Y * X * 4
            # DFT planes
            + (3 * Y * Y + 3 * X * X) * 4
        )
        if per_step <= budget_bytes:
            best = tt
    return best


def sense_forward(data_re, data_im, maps_re, maps_im, weights, *, use_bf16=False):
    """SenseModel forward (adjoint=False). All args float32.

    data:    [B, E, T, Y, X] (re/im)
    maps:    [B, E, C, Y, X] (re/im)  (maps' singleton t-dim already squeezed)
    weights: [B, C, T, Y, X]
    returns (out_re, out_im): [B, C, T, Y, X]
    """
    B, E, T, Y, X = data_re.shape
    _, _, C, _, _ = maps_re.shape

    data = jnp.stack([data_re, data_im])     # [2, B, E, T, Y, X]
    maps = jnp.stack([maps_re, maps_im])     # [2, B, E, C, Y, X]
    fy = _dft_planes(Y)                      # [3, Y, Y]
    fx = _dft_planes(X)                      # [3, X, X]

    tt = _pick_tt(T, E, Y, X)
    grid = (B, C, T // tt)

    data_spec = pl.BlockSpec((2, 1, E, tt, Y, X), lambda b, c, t: (0, b, 0, t, 0, 0))
    maps_spec = pl.BlockSpec((2, 1, E, 1, Y, X), lambda b, c, t: (0, b, 0, c, 0, 0))
    wts_spec = pl.BlockSpec((1, 1, tt, Y, X), lambda b, c, t: (b, c, t, 0, 0))
    fy_spec = pl.BlockSpec((3, Y, Y), lambda b, c, t: (0, 0, 0))
    fx_spec = pl.BlockSpec((3, X, X), lambda b, c, t: (0, 0, 0))
    out_spec = pl.BlockSpec((2, 1, 1, tt, Y, X), lambda b, c, t: (0, b, c, t, 0, 0))

    grid_spec = pltpu.PrefetchScalarGridSpec(
        num_scalar_prefetch=0,
        grid=grid,
        in_specs=[data_spec, maps_spec, wts_spec, fy_spec, fx_spec],
        out_specs=out_spec,
    )

    kernel = functools.partial(
        _sense_forward_kernel,
        compute_dtype=jnp.bfloat16 if use_bf16 else jnp.float32,
    )

    out = pl.pallas_call(
        kernel,
        grid_spec=grid_spec,
        out_shape=jax.ShapeDtypeStruct((2, B, C, T, Y, X), jnp.float32),
        compiler_params=pltpu.CompilerParams(
            # All axes are independent (coil sum is only over E, inside a step),
            # so they can all be sharded across TensorCores on v7x.
            dimension_semantics=("parallel", "parallel", "parallel")),
    )(data, maps, weights, fy, fx)

    return out[0], out[1]


def _reference(data_re, data_im, maps_re, maps_im, weights):
    """Pure-JAX reference mirroring the PyTorch module."""
    data = data_re + 1j * data_im            # [B, E, T, Y, X]
    maps = maps_re + 1j * maps_im            # [B, E, C, Y, X]
    s = jnp.sum(data[:, :, None] * maps[:, :, :, None], axis=1)   # [B, C, T, Y, X]
    ksp = jnp.fft.fftn(s, axes=(-2, -1), norm='ortho')
    out = weights * ksp
    return jnp.real(out).astype(jnp.float32), jnp.imag(out).astype(jnp.float32)


if __name__ == "__main__":
    # Small shapes consistent with the module:
    #   maps:    [B, emaps, coils, 1, Y, X] complex
    #   data:    [B, emaps, T, Y, X]        complex
    #   weights: [B, coils, T, Y, X]
    B, E, C, T, Y, X = 2, 2, 4, 2, 16, 16

    key = jax.random.PRNGKey(0)
    k = jax.random.split(key, 5)
    data_re = jax.random.normal(k[0], (B, E, T, Y, X), dtype=jnp.float32)
    data_im = jax.random.normal(k[1], (B, E, T, Y, X), dtype=jnp.float32)
    maps6_re = jax.random.normal(k[2], (B, E, C, 1, Y, X), dtype=jnp.float32)
    maps6_im = jax.random.normal(k[3], (B, E, C, 1, Y, X), dtype=jnp.float32)
    weights = jax.random.uniform(k[4], (B, C, T, Y, X), dtype=jnp.float32)

    # Squeeze the singleton t-dim of maps for the kernel layout.
    maps_re = maps6_re[:, :, :, 0]
    maps_im = maps6_im[:, :, :, 0]

    out_re, out_im = sense_forward(data_re, data_im, maps_re, maps_im, weights)
    out_re = jax.block_until_ready(out_re)
    out_im = jax.block_until_ready(out_im)

    ref_re, ref_im = _reference(data_re, data_im, maps_re, maps_im, weights)
    assert jnp.allclose(out_re, ref_re, atol=1e-3, rtol=1e-3), "real part mismatch"
    assert jnp.allclose(out_im, ref_im, atol=1e-3, rtol=1e-3), "imag part mismatch"

    print("KERNEL_OK")
</pallas_src>

<mosaic_0001>
module attributes {stable_mosaic.version = 11 : i64} {
  func.func @_sense_forward_kernel(%arg0: i32, %arg1: i32, %arg2: i32, %arg3: memref<2x1x2x2x16x16xf32, #tpu.memory_space<vmem>>, %arg4: memref<2x1x2x1x16x16xf32, #tpu.memory_space<vmem>>, %arg5: memref<1x1x2x16x16xf32, #tpu.memory_space<vmem>>, %arg6: memref<3x16x16xf32, #tpu.memory_space<vmem>>, %arg7: memref<3x16x16xf32, #tpu.memory_space<vmem>>, %arg8: memref<2x1x1x2x16x16xf32, #tpu.memory_space<vmem>>) attributes {dimension_semantics = [#tpu.dimension_semantics<parallel>, #tpu.dimension_semantics<parallel>, #tpu.dimension_semantics<parallel>], iteration_bounds = array<i64: 2, 4, 1>, scalar_prefetch = 0 : i64, scratch_operands = 0 : i64, tpu.core_type = #tpu.core_type<tc>, window_params = [{transform_indices = @transform_0, window_bounds = array<i64: 2, 1, 2, 2, 16, 16>}, {transform_indices = @transform_1, window_bounds = array<i64: 2, 1, 2, 1, 16, 16>}, {transform_indices = @transform_2, window_bounds = array<i64: 1, 1, 2, 16, 16>}, {pipeline_mode = #tpu.pipeline_mode<synchronous>, transform_indices = @transform_3, window_bounds = array<i64: 3, 16, 16>}, {pipeline_mode = #tpu.pipeline_mode<synchronous>, transform_indices = @transform_4, window_bounds = array<i64: 3, 16, 16>}, {transform_indices = @transform_5, window_bounds = array<i64: 2, 1, 1, 2, 16, 16>}]} {
    %c0 = arith.constant 0 : index
    %c0_0 = arith.constant 0 : index
    %c0_1 = arith.constant 0 : index
    %c0_2 = arith.constant 0 : index
    %c0_3 = arith.constant 0 : index
    %c0_4 = arith.constant 0 : index
    %0 = vector.load %arg3[%c0, %c0_0, %c0_1, %c0_2, %c0_3, %c0_4] : memref<2x1x2x2x16x16xf32, #tpu.memory_space<vmem>>, vector<1x1x1x2x16x16xf32>
    %1 = vector.shape_cast %0 : vector<1x1x1x2x16x16xf32> to vector<2x16x16xf32>
    %c0_5 = arith.constant 0 : index
    %c0_6 = arith.constant 0 : index
    %c0_7 = arith.constant 0 : index
    %c0_8 = arith.constant 0 : index
    %c0_9 = arith.constant 0 : index
    %c0_10 = arith.constant 0 : index
    %2 = vector.load %arg4[%c0_5, %c0_6, %c0_7, %c0_8, %c0_9, %c0_10] : memref<2x1x2x1x16x16xf32, #tpu.memory_space<vmem>>, vector<1x1x1x1x16x16xf32>
    %3 = vector.shape_cast %2 : vector<1x1x1x1x16x16xf32> to vector<16x16xf32>
    %4 = vector.shape_cast %3 : vector<16x16xf32> to vector<1x16x16xf32>
    %5 = vector.broadcast %4 : vector<1x16x16xf32> to vector<2x16x16xf32>
    %6 = arith.mulf %1, %5 : vector<2x16x16xf32>
    %c1 = arith.constant 1 : index
    %c0_11 = arith.constant 0 : index
    %c0_12 = arith.constant 0 : index
    %c0_13 = arith.constant 0 : index
    %c0_14 = arith.constant 0 : index
    %c0_15 = arith.constant 0 : index
    %7 = vector.load %arg3[%c1, %c0_11, %c0_12, %c0_13, %c0_14, %c0_15] : memref<2x1x2x2x16x16xf32, #tpu.memory_space<vmem>>, vector<1x1x1x2x16x16xf32>
    %8 = vector.shape_cast %7 : vector<1x1x1x2x16x16xf32> to vector<2x16x16xf32>
    %c1_16 = arith.constant 1 : index
    %c0_17 = arith.constant 0 : index
    %c0_18 = arith.constant 0 : index
    %c0_19 = arith.constant 0 : index
    %c0_20 = arith.constant 0 : index
    %c0_21 = arith.constant 0 : index
    %9 = vector.load %arg4[%c1_16, %c0_17, %c0_18, %c0_19, %c0_20, %c0_21] : memref<2x1x2x1x16x16xf32, #tpu.memory_space<vmem>>, vector<1x1x1x1x16x16xf32>
    %10 = vector.shape_cast %9 : vector<1x1x1x1x16x16xf32> to vector<16x16xf32>
    %11 = vector.shape_cast %10 : vector<16x16xf32> to vector<1x16x16xf32>
    %12 = vector.broadcast %11 : vector<1x16x16xf32> to vector<2x16x16xf32>
    %13 = arith.mulf %8, %12 : vector<2x16x16xf32>
    %14 = arith.subf %6, %13 : vector<2x16x16xf32>
    %c0_22 = arith.constant 0 : index
    %c0_23 = arith.constant 0 : index
    %c0_24 = arith.constant 0 : index
    %c0_25 = arith.constant 0 : index
    %c0_26 = arith.constant 0 : index
    %c0_27 = arith.constant 0 : index
    %15 = vector.load %arg3[%c0_22, %c0_23, %c0_24, %c0_25, %c0_26, %c0_27] : memref<2x1x2x2x16x16xf32, #tpu.memory_space<vmem>>, vector<1x1x1x2x16x16xf32>
    %16 = vector.shape_cast %15 : vector<1x1x1x2x16x16xf32> to vector<2x16x16xf32>
    %c1_28 = arith.constant 1 : index
    %c0_29 = arith.constant 0 : index
    %c0_30 = arith.constant 0 : index
    %c0_31 = arith.constant 0 : index
    %c0_32 = arith.constant 0 : index
    %c0_33 = arith.constant 0 : index
    %17 = vector.load %arg4[%c1_28, %c0_29, %c0_30, %c0_31, %c0_32, %c0_33] : memref<2x1x2x1x16x16xf32, #tpu.memory_space<vmem>>, vector<1x1x1x1x16x16xf32>
    %18 = vector.shape_cast %17 : vector<1x1x1x1x16x16xf32> to vector<16x16xf32>
    %19 = vector.shape_cast %18 : vector<16x16xf32> to vector<1x16x16xf32>
    %20 = vector.broadcast %19 : vector<1x16x16xf32> to vector<2x16x16xf32>
    %21 = arith.mulf %16, %20 : vector<2x16x16xf32>
    %c1_34 = arith.constant 1 : index
    %c0_35 = arith.constant 0 : index
    %c0_36 = arith.constant 0 : index
    %c0_37 = arith.constant 0 : index
    %c0_38 = arith.constant 0 : index
    %c0_39 = arith.constant 0 : index
    %22 = vector.load %arg3[%c1_34, %c0_35, %c0_36, %c0_37, %c0_38, %c0_39] : memref<2x1x2x2x16x16xf32, #tpu.memory_space<vmem>>, vector<1x1x1x2x16x16xf32>
    %23 = vector.shape_cast %22 : vector<1x1x1x2x16x16xf32> to vector<2x16x16xf32>
    %c0_40 = arith.constant 0 : index
    %c0_41 = arith.constant 0 : index
    %c0_42 = arith.constant 0 : index
    %c0_43 = arith.constant 0 : index
    %c0_44 = arith.constant 0 : index
    %c0_45 = arith.constant 0 : index
    %24 = vector.load %arg4[%c0_40, %c0_41, %c0_42, %c0_43, %c0_44, %c0_45] : memref<2x1x2x1x16x16xf32, #tpu.memory_space<vmem>>, vector<1x1x1x1x16x16xf32>
    %25 = vector.shape_cast %24 : vector<1x1x1x1x16x16xf32> to vector<16x16xf32>
    %26 = vector.shape_cast %25 : vector<16x16xf32> to vector<1x16x16xf32>
    %27 = vector.broadcast %26 : vector<1x16x16xf32> to vector<2x16x16xf32>
    %28 = arith.mulf %23, %27 : vector<2x16x16xf32>
    %29 = arith.addf %21, %28 : vector<2x16x16xf32>
    %c0_46 = arith.constant 0 : index
    %c0_47 = arith.constant 0 : index
    %c1_48 = arith.constant 1 : index
    %c0_49 = arith.constant 0 : index
    %c0_50 = arith.constant 0 : index
    %c0_51 = arith.constant 0 : index
    %30 = vector.load %arg3[%c0_46, %c0_47, %c1_48, %c0_49, %c0_50, %c0_51] : memref<2x1x2x2x16x16xf32, #tpu.memory_space<vmem>>, vector<1x1x1x2x16x16xf32>
    %31 = vector.shape_cast %30 : vector<1x1x1x2x16x16xf32> to vector<2x16x16xf32>
    %c0_52 = arith.constant 0 : index
    %c0_53 = arith.constant 0 : index
    %c1_54 = arith.constant 1 : index
    %c0_55 = arith.constant 0 : index
    %c0_56 = arith.constant 0 : index
    %c0_57 = arith.constant 0 : index
    %32 = vector.load %arg4[%c0_52, %c0_53, %c1_54, %c0_55, %c0_56, %c0_57] : memref<2x1x2x1x16x16xf32, #tpu.memory_space<vmem>>, vector<1x1x1x1x16x16xf32>
    %33 = vector.shape_cast %32 : vector<1x1x1x1x16x16xf32> to vector<16x16xf32>
    %34 = vector.shape_cast %33 : vector<16x16xf32> to vector<1x16x16xf32>
    %35 = vector.broadcast %34 : vector<1x16x16xf32> to vector<2x16x16xf32>
    %36 = arith.mulf %31, %35 : vector<2x16x16xf32>
    %37 = arith.addf %14, %36 : vector<2x16x16xf32>
    %c1_58 = arith.constant 1 : index
    %c0_59 = arith.constant 0 : index
    %c1_60 = arith.constant 1 : index
    %c0_61 = arith.constant 0 : index
    %c0_62 = arith.constant 0 : index
    %c0_63 = arith.constant 0 : index
    %38 = vector.load %arg3[%c1_58, %c0_59, %c1_60, %c0_61, %c0_62, %c0_63] : memref<2x1x2x2x16x16xf32, #tpu.memory_space<vmem>>, vector<1x1x1x2x16x16xf32>
    %39 = vector.shape_cast %38 : vector<1x1x1x2x16x16xf32> to vector<2x16x16xf32>
    %c1_64 = arith.constant 1 : index
    %c0_65 = arith.constant 0 : index
    %c1_66 = arith.constant 1 : index
    %c0_67 = arith.constant 0 : index
    %c0_68 = arith.constant 0 : index
    %c0_69 = arith.constant 0 : index
    %40 = vector.load %arg4[%c1_64, %c0_65, %c1_66, %c0_67, %c0_68, %c0_69] : memref<2x1x2x1x16x16xf32, #tpu.memory_space<vmem>>, vector<1x1x1x1x16x16xf32>
    %41 = vector.shape_cast %40 : vector<1x1x1x1x16x16xf32> to vector<16x16xf32>
    %42 = vector.shape_cast %41 : vector<16x16xf32> to vector<1x16x16xf32>
    %43 = vector.broadcast %42 : vector<1x16x16xf32> to vector<2x16x16xf32>
    %44 = arith.mulf %39, %43 : vector<2x16x16xf32>
    %45 = arith.subf %37, %44 : vector<2x16x16xf32>
    %c0_70 = arith.constant 0 : index
    %c0_71 = arith.constant 0 : index
    %c1_72 = arith.constant 1 : index
    %c0_73 = arith.constant 0 : index
    %c0_74 = arith.constant 0 : index
    %c0_75 = arith.constant 0 : index
    %46 = vector.load %arg3[%c0_70, %c0_71, %c1_72, %c0_73, %c0_74, %c0_75] : memref<2x1x2x2x16x16xf32, #tpu.memory_space<vmem>>, vector<1x1x1x2x16x16xf32>
    %47 = vector.shape_cast %46 : vector<1x1x1x2x16x16xf32> to vector<2x16x16xf32>
    %c1_76 = arith.constant 1 : index
    %c0_77 = arith.constant 0 : index
    %c1_78 = arith.constant 1 : index
    %c0_79 = arith.constant 0 : index
    %c0_80 = arith.constant 0 : index
    %c0_81 = arith.constant 0 : index
    %48 = vector.load %arg4[%c1_76, %c0_77, %c1_78, %c0_79, %c0_80, %c0_81] : memref<2x1x2x1x16x16xf32, #tpu.memory_space<vmem>>, vector<1x1x1x1x16x16xf32>
    %49 = vector.shape_cast %48 : vector<1x1x1x1x16x16xf32> to vector<16x16xf32>
    %50 = vector.shape_cast %49 : vector<16x16xf32> to vector<1x16x16xf32>
    %51 = vector.broadcast %50 : vector<1x16x16xf32> to vector<2x16x16xf32>
    %52 = arith.mulf %47, %51 : vector<2x16x16xf32>
    %53 = arith.addf %29, %52 : vector<2x16x16xf32>
    %c1_82 = arith.constant 1 : index
    %c0_83 = arith.constant 0 : index
    %c1_84 = arith.constant 1 : index
    %c0_85 = arith.constant 0 : index
    %c0_86 = arith.constant 0 : index
    %c0_87 = arith.constant 0 : index
    %54 = vector.load %arg3[%c1_82, %c0_83, %c1_84, %c0_85, %c0_86, %c0_87] : memref<2x1x2x2x16x16xf32, #tpu.memory_space<vmem>>, vector<1x1x1x2x16x16xf32>
    %55 = vector.shape_cast %54 : vector<1x1x1x2x16x16xf32> to vector<2x16x16xf32>
    %c0_88 = arith.constant 0 : index
    %c0_89 = arith.constant 0 : index
    %c1_90 = arith.constant 1 : index
    %c0_91 = arith.constant 0 : index
    %c0_92 = arith.constant 0 : index
    %c0_93 = arith.constant 0 : index
    %56 = vector.load %arg4[%c0_88, %c0_89, %c1_90, %c0_91, %c0_92, %c0_93] : memref<2x1x2x1x16x16xf32, #tpu.memory_space<vmem>>, vector<1x1x1x1x16x16xf32>
    %57 = vector.shape_cast %56 : vector<1x1x1x1x16x16xf32> to vector<16x16xf32>
    %58 = vector.shape_cast %57 : vector<16x16xf32> to vector<1x16x16xf32>
    %59 = vector.broadcast %58 : vector<1x16x16xf32> to vector<2x16x16xf32>
    %60 = arith.mulf %55, %59 : vector<2x16x16xf32>
    %61 = arith.addf %53, %60 : vector<2x16x16xf32>
    %c0_94 = arith.constant 0 : index
    %c0_95 = arith.constant 0 : index
    %c0_96 = arith.constant 0 : index
    %62 = vector.load %arg7[%c0_94, %c0_95, %c0_96] : memref<3x16x16xf32, #tpu.memory_space<vmem>>, vector<1x16x16xf32>
    %63 = vector.shape_cast %62 : vector<1x16x16xf32> to vector<16x16xf32>
    %c1_97 = arith.constant 1 : index
    %c0_98 = arith.constant 0 : index
    %c0_99 = arith.constant 0 : index
    %64 = vector.load %arg7[%c1_97, %c0_98, %c0_99] : memref<3x16x16xf32, #tpu.memory_space<vmem>>, vector<1x16x16xf32>
    %65 = vector.shape_cast %64 : vector<1x16x16xf32> to vector<16x16xf32>
    %c2 = arith.constant 2 : index
    %c0_100 = arith.constant 0 : index
    %c0_101 = arith.constant 0 : index
    %66 = vector.load %arg7[%c2, %c0_100, %c0_101] : memref<3x16x16xf32, #tpu.memory_space<vmem>>, vector<1x16x16xf32>
    %67 = vector.shape_cast %66 : vector<1x16x16xf32> to vector<16x16xf32>
    %c0_102 = arith.constant 0 : index
    %c0_103 = arith.constant 0 : index
    %c0_104 = arith.constant 0 : index
    %68 = vector.load %arg6[%c0_102, %c0_103, %c0_104] : memref<3x16x16xf32, #tpu.memory_space<vmem>>, vector<1x16x16xf32>
    %69 = vector.shape_cast %68 : vector<1x16x16xf32> to vector<16x16xf32>
    %c1_105 = arith.constant 1 : index
    %c0_106 = arith.constant 0 : index
    %c0_107 = arith.constant 0 : index
    %70 = vector.load %arg6[%c1_105, %c0_106, %c0_107] : memref<3x16x16xf32, #tpu.memory_space<vmem>>, vector<1x16x16xf32>
    %71 = vector.shape_cast %70 : vector<1x16x16xf32> to vector<16x16xf32>
    %c2_108 = arith.constant 2 : index
    %c0_109 = arith.constant 0 : index
    %c0_110 = arith.constant 0 : index
    %72 = vector.load %arg6[%c2_108, %c0_109, %c0_110] : memref<3x16x16xf32, #tpu.memory_space<vmem>>, vector<1x16x16xf32>
    %73 = vector.shape_cast %72 : vector<1x16x16xf32> to vector<16x16xf32>
    %74 = vector.shape_cast %45 : vector<2x16x16xf32> to vector<32x16xf32>
    %75 = vector.shape_cast %61 : vector<2x16x16xf32> to vector<32x16xf32>
    %76 = arith.addf %74, %75 : vector<32x16xf32>
    %cst = arith.constant dense<0.000000e+00> : vector<32x16xf32>
    %77 = tpu.matmul %76, %63, %cst {dimension_numbers = #tpu.dot_dimension_numbers<[1], [0], [0], [1], [0, 0, 1, 1], [], []>} : vector<32x16xf32>, vector<16x16xf32>, vector<32x16xf32> -> vector<32x16xf32>
    %cst_111 = arith.constant dense<0.000000e+00> : vector<32x16xf32>
    %78 = tpu.matmul %74, %65, %cst_111 {dimension_numbers = #tpu.dot_dimension_numbers<[1], [0], [0], [1], [0, 0, 1, 1], [], []>} : vector<32x16xf32>, vector<16x16xf32>, vector<32x16xf32> -> vector<32x16xf32>
    %cst_112 = arith.constant dense<0.000000e+00> : vector<32x16xf32>
    %79 = tpu.matmul %75, %67, %cst_112 {dimension_numbers = #tpu.dot_dimension_numbers<[1], [0], [0], [1], [0, 0, 1, 1], [], []>} : vector<32x16xf32>, vector<16x16xf32>, vector<32x16xf32> -> vector<32x16xf32>
    %80 = arith.subf %77, %79 : vector<32x16xf32>
    %81 = vector.shape_cast %80 : vector<32x16xf32> to vector<2x16x16xf32>
    %82 = arith.addf %77, %78 : vector<32x16xf32>
    %83 = vector.shape_cast %82 : vector<32x16xf32> to vector<2x16x16xf32>
    %84 = vector.extract_strided_slice %81 {offsets = [0, 0, 0], sizes = [1, 16, 16], strides = [1, 1, 1]} : vector<2x16x16xf32> to vector<1x16x16xf32>
    %85 = vector.shape_cast %84 : vector<1x16x16xf32> to vector<16x16xf32>
    %86 = vector.extract_strided_slice %83 {offsets = [0, 0, 0], sizes = [1, 16, 16], strides = [1, 1, 1]} : vector<2x16x16xf32> to vector<1x16x16xf32>
    %87 = vector.shape_cast %86 : vector<1x16x16xf32> to vector<16x16xf32>
    %88 = arith.addf %85, %87 : vector<16x16xf32>
    %cst_113 = arith.constant dense<0.000000e+00> : vector<16x16xf32>
    %89 = tpu.matmul %69, %88, %cst_113 {dimension_numbers = #tpu.dot_dimension_numbers<[1], [0], [0], [1], [0, 0, 1, 1], [], []>} : vector<16x16xf32>, vector<16x16xf32>, vector<16x16xf32> -> vector<16x16xf32>
    %cst_114 = arith.constant dense<0.000000e+00> : vector<16x16xf32>
    %90 = tpu.matmul %71, %85, %cst_114 {dimension_numbers = #tpu.dot_dimension_numbers<[1], [0], [0], [1], [0, 0, 1, 1], [], []>} : vector<16x16xf32>, vector<16x16xf32>, vector<16x16xf32> -> vector<16x16xf32>
    %cst_115 = arith.constant dense<0.000000e+00> : vector<16x16xf32>
    %91 = tpu.matmul %73, %87, %cst_115 {dimension_numbers = #tpu.dot_dimension_numbers<[1], [0], [0], [1], [0, 0, 1, 1], [], []>} : vector<16x16xf32>, vector<16x16xf32>, vector<16x16xf32> -> vector<16x16xf32>
    %c0_116 = arith.constant 0 : index
    %c0_117 = arith.constant 0 : index
    %c0_118 = arith.constant 0 : index
    %c0_119 = arith.constant 0 : index
    %c0_120 = arith.constant 0 : index
    %92 = vector.load %arg5[%c0_116, %c0_117, %c0_118, %c0_119, %c0_120] : memref<1x1x2x16x16xf32, #tpu.memory_space<vmem>>, vector<1x1x1x16x16xf32>
    %93 = vector.shape_cast %92 : vector<1x1x1x16x16xf32> to vector<16x16xf32>
    %94 = arith.subf %89, %91 : vector<16x16xf32>
    %95 = arith.mulf %93, %94 : vector<16x16xf32>
    %c0_121 = arith.constant 0 : index
    %c0_122 = arith.constant 0 : index
    %c0_123 = arith.constant 0 : index
    %c0_124 = arith.constant 0 : index
    %c0_125 = arith.constant 0 : index
    %c0_126 = arith.constant 0 : index
    %96 = vector.load %arg8[%c0_121, %c0_122, %c0_123, %c0_124, %c0_125, %c0_126] : memref<2x1x1x2x16x16xf32, #tpu.memory_space<vmem>>, vector<1x1x1x1x16x16xf32>
    %97 = vector.shape_cast %96 : vector<1x1x1x1x16x16xf32> to vector<16x16xf32>
    %98 = vector.shape_cast %95 : vector<16x16xf32> to vector<1x1x1x1x16x16xf32>
    tpu.vector_store %arg8[%c0_121, %c0_122, %c0_123, %c0_124, %c0_125, %c0_126], %98 {strides = array<i32>} : memref<2x1x1x2x16x16xf32, #tpu.memory_space<vmem>>, vector<1x1x1x1x16x16xf32>,
    %99 = arith.addf %89, %90 : vector<16x16xf32>
    %100 = arith.mulf %93, %99 : vector<16x16xf32>
    %c1_127 = arith.constant 1 : index
    %c0_128 = arith.constant 0 : index
    %c0_129 = arith.constant 0 : index
    %c0_130 = arith.constant 0 : index
    %c0_131 = arith.constant 0 : index
    %c0_132 = arith.constant 0 : index
    %101 = vector.load %arg8[%c1_127, %c0_128, %c0_129, %c0_130, %c0_131, %c0_132] : memref<2x1x1x2x16x16xf32, #tpu.memory_space<vmem>>, vector<1x1x1x1x16x16xf32>
    %102 = vector.shape_cast %101 : vector<1x1x1x1x16x16xf32> to vector<16x16xf32>
    %103 = vector.shape_cast %100 : vector<16x16xf32> to vector<1x1x1x1x16x16xf32>
    tpu.vector_store %arg8[%c1_127, %c0_128, %c0_129, %c0_130, %c0_131, %c0_132], %103 {strides = array<i32>} : memref<2x1x1x2x16x16xf32, #tpu.memory_space<vmem>>, vector<1x1x1x1x16x16xf32>,
    %104 = vector.extract_strided_slice %81 {offsets = [1, 0, 0], sizes = [1, 16, 16], strides = [1, 1, 1]} : vector<2x16x16xf32> to vector<1x16x16xf32>
    %105 = vector.shape_cast %104 : vector<1x16x16xf32> to vector<16x16xf32>
    %106 = vector.extract_strided_slice %83 {offsets = [1, 0, 0], sizes = [1, 16, 16], strides = [1, 1, 1]} : vector<2x16x16xf32> to vector<1x16x16xf32>
    %107 = vector.shape_cast %106 : vector<1x16x16xf32> to vector<16x16xf32>
    %108 = arith.addf %105, %107 : vector<16x16xf32>
    %cst_133 = arith.constant dense<0.000000e+00> : vector<16x16xf32>
    %109 = tpu.matmul %69, %108, %cst_133 {dimension_numbers = #tpu.dot_dimension_numbers<[1], [0], [0], [1], [0, 0, 1, 1], [], []>} : vector<16x16xf32>, vector<16x16xf32>, vector<16x16xf32> -> vector<16x16xf32>
    %cst_134 = arith.constant dense<0.000000e+00> : vector<16x16xf32>
    %110 = tpu.matmul %71, %105, %cst_134 {dimension_numbers = #tpu.dot_dimension_numbers<[1], [0], [0], [1], [0, 0, 1, 1], [], []>} : vector<16x16xf32>, vector<16x16xf32>, vector<16x16xf32> -> vector<16x16xf32>
    %cst_135 = arith.constant dense<0.000000e+00> : vector<16x16xf32>
    %111 = tpu.matmul %73, %107, %cst_135 {dimension_numbers = #tpu.dot_dimension_numbers<[1], [0], [0], [1], [0, 0, 1, 1], [], []>} : vector<16x16xf32>, vector<16x16xf32>, vector<16x16xf32> -> vector<16x16xf32>
    %c0_136 = arith.constant 0 : index
    %c0_137 = arith.constant 0 : index
    %c1_138 = arith.constant 1 : index
    %c0_139 = arith.constant 0 : index
    %c0_140 = arith.constant 0 : index
    %112 = vector.load %arg5[%c0_136, %c0_137, %c1_138, %c0_139, %c0_140] : memref<1x1x2x16x16xf32, #tpu.memory_space<vmem>>, vector<1x1x1x16x16xf32>
    %113 = vector.shape_cast %112 : vector<1x1x1x16x16xf32> to vector<16x16xf32>
    %114 = arith.subf %109, %111 : vector<16x16xf32>
    %115 = arith.mulf %113, %114 : vector<16x16xf32>
    %c0_141 = arith.constant 0 : index
    %c0_142 = arith.constant 0 : index
    %c0_143 = arith.constant 0 : index
    %c1_144 = arith.constant 1 : index
    %c0_145 = arith.constant 0 : index
    %c0_146 = arith.constant 0 : index
    %116 = vector.load %arg8[%c0_141, %c0_142, %c0_143, %c1_144, %c0_145, %c0_146] : memref<2x1x1x2x16x16xf32, #tpu.memory_space<vmem>>, vector<1x1x1x1x16x16xf32>
    %117 = vector.shape_cast %116 : vector<1x1x1x1x16x16xf32> to vector<16x16xf32>
    %118 = vector.shape_cast %115 : vector<16x16xf32> to vector<1x1x1x1x16x16xf32>
    tpu.vector_store %arg8[%c0_141, %c0_142, %c0_143, %c1_144, %c0_145, %c0_146], %118 {strides = array<i32>} : memref<2x1x1x2x16x16xf32, #tpu.memory_space<vmem>>, vector<1x1x1x1x16x16xf32>,
    %119 = arith.addf %109, %110 : vector<16x16xf32>
    %120 = arith.mulf %113, %119 : vector<16x16xf32>
    %c1_147 = arith.constant 1 : index
    %c0_148 = arith.constant 0 : index
    %c0_149 = arith.constant 0 : index
    %c1_150 = arith.constant 1 : index
    %c0_151 = arith.constant 0 : index
    %c0_152 = arith.constant 0 : index
    %121 = vector.load %arg8[%c1_147, %c0_148, %c0_149, %c1_150, %c0_151, %c0_152] : memref<2x1x1x2x16x16xf32, #tpu.memory_space<vmem>>, vector<1x1x1x1x16x16xf32>
    %122 = vector.shape_cast %121 : vector<1x1x1x1x16x16xf32> to vector<16x16xf32>
    %123 = vector.shape_cast %120 : vector<16x16xf32> to vector<1x1x1x1x16x16xf32>
    tpu.vector_store %arg8[%c1_147, %c0_148, %c0_149, %c1_150, %c0_151, %c0_152], %123 {strides = array<i32>} : memref<2x1x1x2x16x16xf32, #tpu.memory_space<vmem>>, vector<1x1x1x1x16x16xf32>,
    return
  }
  func.func @transform_0(%arg0: i32, %arg1: i32, %arg2: i32) -> (i32, i32, i32, i32, i32, i32) {
    %c0_i32 = arith.constant 0 : i32
    %c0_i32_0 = arith.constant 0 : i32
    %c0_i32_1 = arith.constant 0 : i32
    %c0_i32_2 = arith.constant 0 : i32
    %c0_i32_3 = arith.constant 0 : i32
    return %c0_i32, %arg0, %c0_i32_0, %arg2, %c0_i32_1, %c0_i32_2 : i32, i32, i32, i32, i32, i32
  }
  func.func @transform_1(%arg0: i32, %arg1: i32, %arg2: i32) -> (i32, i32, i32, i32, i32, i32) {
    %c0_i32 = arith.constant 0 : i32
    %c0_i32_0 = arith.constant 0 : i32
    %c0_i32_1 = arith.constant 0 : i32
    %c0_i32_2 = arith.constant 0 : i32
    %c0_i32_3 = arith.constant 0 : i32
    return %c0_i32, %arg0, %c0_i32_0, %arg1, %c0_i32_1, %c0_i32_2 : i32, i32, i32, i32, i32, i32
  }
  func.func @transform_2(%arg0: i32, %arg1: i32, %arg2: i32) -> (i32, i32, i32, i32, i32) {
    %c0_i32 = arith.constant 0 : i32
    %c0_i32_0 = arith.constant 0 : i32
    %c0_i32_1 = arith.constant 0 : i32
    return %arg0, %arg1, %arg2, %c0_i32, %c0_i32_0 : i32, i32, i32, i32, i32
  }
  func.func @transform_3(%arg0: i32, %arg1: i32, %arg2: i32) -> (i32, i32, i32) {
    %c0_i32 = arith.constant 0 : i32
    %c0_i32_0 = arith.constant 0 : i32
    %c0_i32_1 = arith.constant 0 : i32
    %c0_i32_2 = arith.constant 0 : i32
    return %c0_i32, %c0_i32_0, %c0_i32_1 : i32, i32, i32
  }
  func.func @transform_4(%arg0: i32, %arg1: i32, %arg2: i32) -> (i32, i32, i32) {
    %c0_i32 = arith.constant 0 : i32
    %c0_i32_0 = arith.constant 0 : i32
    %c0_i32_1 = arith.constant 0 : i32
    %c0_i32_2 = arith.constant 0 : i32
    return %c0_i32, %c0_i32_0, %c0_i32_1 : i32, i32, i32
  }
  func.func @transform_5(%arg0: i32, %arg1: i32, %arg2: i32) -> (i32, i32, i32, i32, i32, i32) {
    %c0_i32 = arith.constant 0 : i32
    %c0_i32_0 = arith.constant 0 : i32
    %c0_i32_1 = arith.constant 0 : i32
    %c0_i32_2 = arith.constant 0 : i32
    return %c0_i32, %arg0, %arg1, %arg2, %c0_i32_0, %c0_i32_1 : i32, i32, i32, i32, i32, i32
  }
}

</mosaic_0001>

<llo_original>
// kernel: tpu_custom_call.1
$region0: #{tpu_custom_call.1}
  #allocation0 [shape = 'u32[]', space=smem, size = 0x4, offset = 0x4, fixed_abs, tag = 'smem constant byte address 0x4 - core index']
  #allocation1 [shape = 'u32[72,128]{1,0:T(1,128)}', space=vmem, size = 0x9000, scoped, tag = 'internal scratch']
  #allocation12 [shape = 's32[]', space=sflag, size = 0x4, offset = 0, fixed_abs, tag = 'sflag constant byte address 0x0 - dummy sync flag']
  #allocation14 [shape = 's32[]', space=sflag, size = 0x4, offset = 0, fixed_abs, tag = 'sflag constant byte address 0x0 - dummy sync flag']
  #allocation16 [shape = 's32[]', space=sflag, size = 0x4, offset = 0, fixed_abs, tag = 'sflag constant byte address 0x0 - dummy sync flag']
  %s0 = inlined_call_operand.hbm [shape: f32[2,2,2,2,16,16], index: 0, kind: input, shape index: {}]
  %s1 = inlined_call_operand.hbm [shape: f32[2,2,2,4,16,16], index: 1, kind: input, shape index: {}]
  %s2 = inlined_call_operand.hbm [shape: f32[2,4,2,16,16], index: 2, kind: input, shape index: {}]
  %s3 = inlined_call_operand.hbm [shape: f32[3,16,16], index: 3, kind: input, shape index: {}]
  %s4 = inlined_call_operand.hbm [shape: f32[3,16,16], index: 4, kind: input, shape index: {}]
  %s5 = inlined_call_operand.hbm [shape: f32[2,2,4,2,16,16], index: 5, kind: output, shape index: {}]
  %s6 = sld [smem:[#allocation0]]
  $region73: #{tpu_custom_call.1} parent=0
    _
  %s8 = ssub.s32 1, %s6
  %s9 = scalar_select 0, %s8, %s6
  $region1: #{tpu_custom_call.1} parent=0
    #allocation2 [shape = 'u8[131072]{0}', space=vmem, size = 0x20000, scoped, tag = 'input window, operand 0']
    #allocation3 [shape = 's32[2]{0}', space=sflag, size = 0x8, scoped, tag = 'scoped memory for tpu_custom_call.1']
    #allocation4 [shape = 's32[2]{0}', space=sflag, size = 0x8, scoped, tag = 'scoped memory for tpu_custom_call.1']
    #allocation5 [shape = 'u8[65536]{0}', space=vmem, size = 0x10000, scoped, tag = 'input window, operand 1']
    #allocation6 [shape = 's32[2]{0}', space=sflag, size = 0x8, scoped, tag = 'scoped memory for tpu_custom_call.1']
    #allocation7 [shape = 'u8[32768]{0}', space=vmem, size = 0x8000, scoped, tag = 'input window, operand 2']
    #allocation8 [shape = 'u8[24576]{0}', space=vmem, size = 0x6000, scoped, tag = 'input window, operand 3, single buffered']
    #allocation9 [shape = 's32[1]{0}', space=sflag, size = 0x4, scoped, tag = 'scoped memory for tpu_custom_call.1']
    #allocation10 [shape = 'u8[24576]{0}', space=vmem, size = 0x6000, scoped, tag = 'input window, operand 4, single buffered']
    #allocation11 [shape = 'u8[65536]{0}', space=vmem, size = 0x10000, scoped, tag = 'output window, operand 0']
    %10 = vsyncpa [#allocation3], 0
    %s11 = scalar_lea.sflag [#allocation3], 1
    %12 = vsyncpa %s11, 0
    %13 = vsyncpa [#allocation6], 0
    %s14 = scalar_lea.sflag [#allocation6], 1
    %15 = vsyncpa %s14, 0
    %16 = vsyncpa [#allocation9], 0
    %17 = vsyncpa [#allocation4], 0
    %s18 = scalar_lea.sflag [#allocation4], 1
    %19 = vsyncpa %s18, 0
    loop: start=0, step=1, limit=10
    $region2: #{tpu_custom_call.1} parent=1 // loop_pre_header
      _
    $region3: #{tpu_custom_call.1} parent=1 // loop_header
      %s21 = sphi 0, %s25
      %p22 = scmp.ge.s32.totalorder %s21, 10
      %s28 = sphi 0, %s47
      %s29 = sphi 0, %s43
      %s30 = sphi 0, %s39
      %s31 = sphi 0, %s28
      %s32 = sphi 0, %s29
      %s33 = sphi 0, %s30
      %s34 = sphi 0, %s31
      %s35 = sphi 0, %s32
      %s36 = sphi 0, %s33
      %s52 = sphi 0, %s54
      %s55 = sphi 0, %s52
      %s56 = sphi 0, %s55
      %s72 = sphi 0, %s56
      %s80 = sphi 0, %s82
      %s83 = sphi 0, %s80
      %s84 = sphi 0, %s83
      %s100 = sphi 0, %s84
      %s110 = sphi 0, %s112
      %s113 = sphi 0, %s110
      %s114 = sphi 0, %s113
      %s130 = sphi 0, %s114
      %s134 = sphi 0, %s134
      %s136 = sphi 0, %s134
      %s137 = sphi 0, %s136
      %s151 = sphi 0, %s137
      %s155 = sphi 0, %s155
      %s157 = sphi 0, %s155
      %s158 = sphi 0, %s157
      %s172 = sphi 0, %s158
      %s182 = sphi 0, %s184
      %s185 = sphi 0, %s182
      %s186 = sphi 0, %s185
      %s202 = sphi 0, %s186
    $region4: #{tpu_custom_call.1} parent=1 // loop_header_branch
      %24 = sbr.rel (%p22) target = $region8
    $region5: #{tpu_custom_call.1} parent=1 // loop_body
      %s26 = ssub.s32 %s21, 1
      %s27 = ssub.s32 %s21, 2
      %s37 = sadd.s32 1, %s30
      %p38 = scmp.ge.s32.totalorder %s37, 1
      %s39 = scalar_select %p38, 0, %s37
      %s40 = sadd.s32 1, %s29
      %s41 = scalar_select %p38, %s40, %s29
      %p42 = scmp.ge.s32.totalorder %s41, 4
      %s43 = scalar_select %p42, 0, %s41
      %s44 = sadd.s32 1, %s28
      %s45 = scalar_select %p42, %s44, %s28
      %p46 = scmp.ge.s32.totalorder %s45, 2
      %s47 = scalar_select %p46, 0, %s45
      %s48 = ssub.s32 %s28, %s47
      %s49 = ssub.s32 %s30, %s39
      %s50 = sor.u32 %s48, %s49
      %p51 = scmp.eq.s32.totalorder %s50, 0
      %s53 = sadd.s32 %s52, 1
      %s54 = scalar_select %p51, %s52, %s53
      %p57 = pneg %p51
      %p58 = scmp.eq.s32.totalorder %s21, 7
      %p59 = por %p57, %p58
      %p60 = scmp.ne.s32.totalorder %s52, %s55
      %p61 = scmp.eq.s32.totalorder %s21, 0
      %p62 = por %p60, %p61
      %p63 = scmp.ne.s32.totalorder %s52, %s55
      %p64 = scmp.eq.s32.totalorder %s26, 7
      %p65 = por %p63, %p64
      %p66 = scmp.ne.s32.totalorder %s55, %s56
      %p67 = scmp.eq.s32.totalorder %s26, 0
      %p68 = por %p66, %p67
      %p69 = scmp.ne.s32.totalorder %s55, %s56
      %p70 = scmp.eq.s32.totalorder %s27, 7
      %p71 = por %p69, %p70
      %p73 = scmp.ne.s32.totalorder %s56, %s72
      %p74 = scmp.eq.s32.totalorder %s27, 0
      %p75 = por %p73, %p74
      %s76 = ssub.s32 %s28, %s47
      %s77 = ssub.s32 %s29, %s43
      %s78 = sor.u32 %s76, %s77
      %p79 = scmp.eq.s32.totalorder %s78, 0
      %s81 = sadd.s32 %s80, 1
      %s82 = scalar_select %p79, %s80, %s81
      %p85 = pneg %p79
      %p86 = scmp.eq.s32.totalorder %s21, 7
      %p87 = por %p85, %p86
      %p88 = scmp.ne.s32.totalorder %s80, %s83
      %p89 = scmp.eq.s32.totalorder %s21, 0
      %p90 = por %p88, %p89
      %p91 = scmp.ne.s32.totalorder %s80, %s83
      %p92 = scmp.eq.s32.totalorder %s26, 7
      %p93 = por %p91, %p92
      %p94 = scmp.ne.s32.totalorder %s83, %s84
      %p95 = scmp.eq.s32.totalorder %s26, 0
      %p96 = por %p94, %p95
      %p97 = scmp.ne.s32.totalorder %s83, %s84
      %p98 = scmp.eq.s32.totalorder %s27, 7
      %p99 = por %p97, %p98
      %p101 = scmp.ne.s32.totalorder %s84, %s100
      %p102 = scmp.eq.s32.totalorder %s27, 0
      %p103 = por %p101, %p102
      %s104 = ssub.s32 %s28, %s47
      %s105 = ssub.s32 %s29, %s43
      %s106 = sor.u32 %s104, %s105
      %s107 = ssub.s32 %s30, %s39
      %s108 = sor.u32 %s106, %s107
      %p109 = scmp.eq.s32.totalorder %s108, 0
      %s111 = sadd.s32 %s110, 1
      %s112 = scalar_select %p109, %s110, %s111
      %p115 = pneg %p109
      %p116 = scmp.eq.s32.totalorder %s21, 7
      %p117 = por %p115, %p116
      %p118 = scmp.ne.s32.totalorder %s110, %s113
      %p119 = scmp.eq.s32.totalorder %s21, 0
      %p120 = por %p118, %p119
      %p121 = scmp.ne.s32.totalorder %s110, %s113
      %p122 = scmp.eq.s32.totalorder %s26, 7
      %p123 = por %p121, %p122
      %p124 = scmp.ne.s32.totalorder %s113, %s114
      %p125 = scmp.eq.s32.totalorder %s26, 0
      %p126 = por %p124, %p125
      %p127 = scmp.ne.s32.totalorder %s113, %s114
      %p128 = scmp.eq.s32.totalorder %s27, 7
      %p129 = por %p127, %p128
      %p131 = scmp.ne.s32.totalorder %s114, %s130
      %p132 = scmp.eq.s32.totalorder %s27, 0
      %p133 = por %p131, %p132
      %s135 = sadd.s32 %s134, 1
      %p138 = scmp.eq.s32.totalorder %s21, 7
      %p139 = scmp.ne.s32.totalorder %s134, %s136
      %p140 = scmp.eq.s32.totalorder %s21, 0
      %p141 = por %p139, %p140
      %p142 = scmp.ne.s32.totalorder %s134, %s136
      %p143 = scmp.eq.s32.totalorder %s26, 7
      %p144 = por %p142, %p143
      %p145 = scmp.ne.s32.totalorder %s136, %s137
      %p146 = scmp.eq.s32.totalorder %s26, 0
      %p147 = por %p145, %p146
      %p148 = scmp.ne.s32.totalorder %s136, %s137
      %p149 = scmp.eq.s32.totalorder %s27, 7
      %p150 = por %p148, %p149
      %p152 = scmp.ne.s32.totalorder %s137, %s151
      %p153 = scmp.eq.s32.totalorder %s27, 0
      %p154 = por %p152, %p153
      %s156 = sadd.s32 %s155, 1
      %p159 = scmp.eq.s32.totalorder %s21, 7
      %p160 = scmp.ne.s32.totalorder %s155, %s157
      %p161 = scmp.eq.s32.totalorder %s21, 0
      %p162 = por %p160, %p161
      %p163 = scmp.ne.s32.totalorder %s155, %s157
      %p164 = scmp.eq.s32.totalorder %s26, 7
      %p165 = por %p163, %p164
      %p166 = scmp.ne.s32.totalorder %s157, %s158
      %p167 = scmp.eq.s32.totalorder %s26, 0
      %p168 = por %p166, %p167
      %p169 = scmp.ne.s32.totalorder %s157, %s158
      %p170 = scmp.eq.s32.totalorder %s27, 7
      %p171 = por %p169, %p170
      %p173 = scmp.ne.s32.totalorder %s158, %s172
      %p174 = scmp.eq.s32.totalorder %s27, 0
      %p175 = por %p173, %p174
      %s176 = ssub.s32 %s28, %s47
      %s177 = ssub.s32 %s29, %s43
      %s178 = sor.u32 %s176, %s177
      %s179 = ssub.s32 %s30, %s39
      %s180 = sor.u32 %s178, %s179
      %p181 = scmp.eq.s32.totalorder %s180, 0
      %s183 = sadd.s32 %s182, 1
      %s184 = scalar_select %p181, %s182, %s183
      %p187 = pneg %p181
      %p188 = scmp.eq.s32.totalorder %s21, 7
      %p189 = por %p187, %p188
      %p190 = scmp.ne.s32.totalorder %s182, %s185
      %p191 = scmp.eq.s32.totalorder %s21, 0
      %p192 = por %p190, %p191
      %p193 = scmp.ne.s32.totalorder %s182, %s185
      %p194 = scmp.eq.s32.totalorder %s26, 7
      %p195 = por %p193, %p194
      %p196 = scmp.ne.s32.totalorder %s185, %s186
      %p197 = scmp.eq.s32.totalorder %s26, 0
      %p198 = por %p196, %p197
      %p199 = scmp.ne.s32.totalorder %s185, %s186
      %p200 = scmp.eq.s32.totalorder %s27, 7
      %p201 = por %p199, %p200
      %p203 = scmp.ne.s32.totalorder %s186, %s202
      %p204 = scmp.eq.s32.totalorder %s27, 0
      %p205 = por %p203, %p204
      %p206 = scmp.le.s32.totalorder 1, %s21
      %p207 = scmp.lt.s32.totalorder %s21, 9
      %p208 = pnand %p206, %p207
      %p209 = pneg %p208
      // Predicated region
      $region9: #{tpu_custom_call.1} parent=5 // pred_check
        _
      $region10: #{tpu_custom_call.1} parent=5 // pred_check_branch
        %211 = sbr.rel (%p208) target = $region12
      $region11: #{tpu_custom_call.1} parent=5 // pred_region
        %s212 = ssub.s32 %s21, 1
        // Predicated region
        $region13: #{tpu_custom_call.1} parent=11 // pred_check
          %p213 = pneg %p147
        $region14: #{tpu_custom_call.1} parent=11 // pred_check_branch
          %215 = sbr.rel (%p213) target = $region16
        $region15: #{tpu_custom_call.1} parent=11 // pred_region
          %217 = vsyncadd [#allocation9], 0
          %s218 = sshll.u32 %s3, 4
          %s219 = int_to_ptr.hbm [resolvable:$true] %s218
          %s220 = sshll.u32 [#allocation8], 4
          %s221 = int_to_ptr.vmem [resolvable:$true] %s220
          %226 = dma.hbm_to_vmem [thread:$0]  %s219, 768, %s221, [#allocation9], 128, 128, 8
        $region16: #{tpu_custom_call.1} parent=11 // pred_fallthru
          _
        // Predicated region
        $region17: #{tpu_custom_call.1} parent=11 // pred_check
          %p227 = pneg %p168
        $region18: #{tpu_custom_call.1} parent=11 // pred_check_branch
          %229 = sbr.rel (%p227) target = $region20
        $region19: #{tpu_custom_call.1} parent=11 // pred_region
          %231 = vsyncadd [#allocation9], 0
          %s232 = sshll.u32 %s4, 4
          %s233 = int_to_ptr.hbm [resolvable:$true] %s232
          %s234 = sshll.u32 [#allocation10], 4
          %s235 = int_to_ptr.vmem [resolvable:$true] %s234
          %240 = dma.hbm_to_vmem [thread:$0]  %s233, 768, %s235, [#allocation9], 128, 128, 8
        $region20: #{tpu_custom_call.1} parent=11 // pred_fallthru
          _
      $region12: #{tpu_custom_call.1} parent=5 // pred_fallthru
        _
      %p241 = scmp.lt.s32.totalorder %s21, 8
      // Predicated region
      $region21: #{tpu_custom_call.1} parent=5 // pred_check
        %p242 = pneg %p241
      $region22: #{tpu_custom_call.1} parent=5 // pred_check_branch
        %244 = sbr.rel (%p242) target = $region24
      $region23: #{tpu_custom_call.1} parent=5 // pred_region
        // Predicated region
        $region25: #{tpu_custom_call.1} parent=23 // pred_check
          %p245 = pneg %p62
        $region26: #{tpu_custom_call.1} parent=23 // pred_check_branch
          %247 = sbr.rel (%p245) target = $region28
        $region27: #{tpu_custom_call.1} parent=23 // pred_region
          #allocation13 [shape = 'u32[6]{0}', space=smem, size = 0x18, scoped, tag = 'DMA stride descriptor']
          %s248 = sand.u32 %s52, 1
          %s249 = scalar_lea.sflag [#allocation3], %s248
          %s250 = sand.u32 %s52, 1
          %s251 = smul.addr %s250, 128
          %s252 = scalar_lea.vmem [#allocation2], %s251
          %s253 = smul.u32 2, %s30
          %255 = vsyncadd %s249, 0
          %s256 = smul.addr %s253, 2
          %s257 = smul.addr %s28, 8
          %s258 = sadd.s32 %s256, %s257
          %s259 = smul.addr %s258, 8
          %s260 = scalar_lea.hbm %s0, %s259
          %s262 = sshll.u32 1, 14
          %s263 = sxor.u32 4294967295, %s262
          %s265 = sld [smem:[#allocation0]]
          %s266 = sadd.s32 2, %s265
          %s268 = sshll.u32 7, 26
          %s269 = sxor.u32 4294967295, %s268
          %s270 = sand.u32 0, %s269
          %s271 = sshll.u32 %s266, 26
          %s272 = sor.u32 %s270, %s271
          %s273 = sshll.u32 %s260, 4
          %s274 = int_to_ptr.hbm [resolvable:$true] %s273
          %s275 = sshll.u32 %s252, 4
          %s276 = int_to_ptr.vmem [resolvable:$true] %s275
          %282 = sst [smem:[#allocation13]] 2048
          %s283 = scalar_lea.smem [#allocation13], 1
          %284 = sst [smem:[%s283]] 1024
          %s285 = scalar_lea.smem [#allocation13], 2
          %286 = sst [smem:[%s285]] 8
          %s287 = scalar_lea.smem [#allocation13], 3
          %288 = sst [smem:[%s287]] 128
          %s289 = scalar_lea.smem [#allocation13], 4
          %290 = sst [smem:[%s289]] 128
          %s291 = scalar_lea.smem [#allocation13], 5
          %292 = sst [smem:[%s291]] 8
          %294 = dma.general %s274, 2048, %s276, %s249, [#allocation12], [#allocation13], %s272, 0
        $region28: #{tpu_custom_call.1} parent=23 // pred_fallthru
          _
        // Predicated region
        $region29: #{tpu_custom_call.1} parent=23 // pred_check
          %p295 = pneg %p90
        $region30: #{tpu_custom_call.1} parent=23 // pred_check_branch
          %297 = sbr.rel (%p295) target = $region32
        $region31: #{tpu_custom_call.1} parent=23 // pred_region
          #allocation15 [shape = 'u32[9]{0}', space=smem, size = 0x24, scoped, tag = 'DMA stride descriptor']
          %s298 = sand.u32 %s21, 1
          %s299 = scalar_lea.sflag [#allocation6], %s298
          %s300 = sand.u32 %s80, 1
          %s301 = smul.addr %s300, 64
          %s302 = scalar_lea.vmem [#allocation5], %s301
          %304 = vsyncadd %s299, 0
          %s305 = smul.addr %s29, 2
          %s306 = smul.addr %s28, 16
          %s307 = sadd.s32 %s305, %s306
          %s308 = smul.addr %s307, 8
          %s309 = scalar_lea.hbm %s1, %s308
          %s311 = sshll.u32 1, 14
          %s312 = sxor.u32 4294967295, %s311
          %s314 = sld [smem:[#allocation0]]
          %s315 = sadd.s32 2, %s314
          %s317 = sshll.u32 7, 26
          %s318 = sxor.u32 4294967295, %s317
          %s319 = sand.u32 0, %s318
          %s320 = sshll.u32 %s315, 26
          %s321 = sor.u32 %s319, %s320
          %s322 = sshll.u32 %s309, 4
          %s323 = int_to_ptr.hbm [resolvable:$true] %s322
          %s324 = sshll.u32 %s302, 4
          %s325 = int_to_ptr.vmem [resolvable:$true] %s324
          %333 = sst [smem:[#allocation15]] 4096
          %s334 = scalar_lea.smem [#allocation15], 1
          %335 = sst [smem:[%s334]] 512
          %s336 = scalar_lea.smem [#allocation15], 2
          %337 = sst [smem:[%s336]] 2
          %s338 = scalar_lea.smem [#allocation15], 3
          %339 = sst [smem:[%s338]] 1024
          %s340 = scalar_lea.smem [#allocation15], 4
          %341 = sst [smem:[%s340]] 256
          %s342 = scalar_lea.smem [#allocation15], 5
          %343 = sst [smem:[%s342]] 2
          %s344 = scalar_lea.smem [#allocation15], 6
          %345 = sst [smem:[%s344]] 128
          %s346 = scalar_lea.smem [#allocation15], 7
          %347 = sst [smem:[%s346]] 128
          %s348 = scalar_lea.smem [#allocation15], 8
          %349 = sst [smem:[%s348]] 8
          %351 = dma.general %s323, 1024, %s325, %s299, [#allocation14], [#allocation15], %s321, 0
        $region32: #{tpu_custom_call.1} parent=23 // pred_fallthru
          _
        // Predicated region
        $region33: #{tpu_custom_call.1} parent=23 // pred_check
          %p352 = pneg %p120
        $region34: #{tpu_custom_call.1} parent=23 // pred_check_branch
          %354 = sbr.rel (%p352) target = $region36
        $region35: #{tpu_custom_call.1} parent=23 // pred_region
          %s355 = sand.u32 %s21, 1
          %s356 = scalar_lea.sflag [#allocation6], %s355
          %s357 = sand.u32 %s110, 1
          %s358 = smul.addr %s357, 32
          %s359 = scalar_lea.vmem [#allocation7], %s358
          %s360 = smul.u32 2, %s30
          %362 = vsyncadd %s356, 0
          %s363 = smul.addr %s360, 2
          %s364 = smul.addr %s29, 4
          %s365 = sadd.s32 %s363, %s364
          %s366 = smul.addr %s28, 16
          %s367 = sadd.s32 %s365, %s366
          %s368 = smul.addr %s367, 8
          %s369 = scalar_lea.hbm %s2, %s368
          %s370 = sshll.u32 %s369, 4
          %s371 = int_to_ptr.hbm [resolvable:$true] %s370
          %s372 = sshll.u32 %s359, 4
          %s373 = int_to_ptr.vmem [resolvable:$true] %s372
          %378 = dma.hbm_to_vmem [thread:$0]  %s371, 512, %s373, %s356, 128, 128, 8
        $region36: #{tpu_custom_call.1} parent=23 // pred_fallthru
          _
      $region24: #{tpu_custom_call.1} parent=5 // pred_fallthru
        _
      %p379 = scmp.le.s32.totalorder 1, %s21
      %p380 = scmp.lt.s32.totalorder %s21, 9
      %p381 = pnand %p379, %p380
      %p382 = pneg %p381
      // Predicated region
      $region37: #{tpu_custom_call.1} parent=5 // pred_check
        _
      $region38: #{tpu_custom_call.1} parent=5 // pred_check_branch
        %384 = sbr.rel (%p381) target = $region40
      $region39: #{tpu_custom_call.1} parent=5 // pred_region
        %s385 = ssub.s32 %s21, 1
        %s386 = sand.u32 %s55, 1
        %s387 = scalar_lea.sflag [#allocation3], %s386
        %s388 = sand.u32 %s55, 1
        %s389 = smul.addr %s388, 128
        %s390 = scalar_lea.vmem [#allocation2], %s389
        // Predicated region
        $region41: #{tpu_custom_call.1} parent=39 // pred_check
          %p391 = pneg %p68
        $region42: #{tpu_custom_call.1} parent=39 // pred_check_branch
          %393 = sbr.rel (%p391) target = $region44
        $region43: #{tpu_custom_call.1} parent=39 // pred_region
          %395 = dma.done %s387, 2048
        $region44: #{tpu_custom_call.1} parent=39 // pred_fallthru
          _
        %s396 = sand.u32 %s26, 1
        %s397 = scalar_lea.sflag [#allocation6], %s396
        %s398 = sand.u32 %s83, 1
        %s399 = smul.addr %s398, 64
        %s400 = scalar_lea.vmem [#allocation5], %s399
        // Predicated region
        $region45: #{tpu_custom_call.1} parent=39 // pred_check
          %p401 = pneg %p96
        $region46: #{tpu_custom_call.1} parent=39 // pred_check_branch
          %403 = sbr.rel (%p401) target = $region48
        $region47: #{tpu_custom_call.1} parent=39 // pred_region
          %405 = dma.done %s397, 1024
        $region48: #{tpu_custom_call.1} parent=39 // pred_fallthru
          _
        %s406 = sand.u32 %s26, 1
        %s407 = scalar_lea.sflag [#allocation6], %s406
        %s408 = sand.u32 %s113, 1
        %s409 = smul.addr %s408, 32
        %s410 = scalar_lea.vmem [#allocation7], %s409
        // Predicated region
        $region49: #{tpu_custom_call.1} parent=39 // pred_check
          %p411 = pneg %p126
        $region50: #{tpu_custom_call.1} parent=39 // pred_check_branch
          %413 = sbr.rel (%p411) target = $region52
        $region51: #{tpu_custom_call.1} parent=39 // pred_region
          %415 = dma.done %s407, 512
        $region52: #{tpu_custom_call.1} parent=39 // pred_fallthru
          _
        // Predicated region
        $region53: #{tpu_custom_call.1} parent=39 // pred_check
          %p416 = pneg %p147
        $region54: #{tpu_custom_call.1} parent=39 // pred_check_branch
          %418 = sbr.rel (%p416) target = $region56
        $region55: #{tpu_custom_call.1} parent=39 // pred_region
          %420 = dma.done [#allocation9], 768
        $region56: #{tpu_custom_call.1} parent=39 // pred_fallthru
          _
        // Predicated region
        $region57: #{tpu_custom_call.1} parent=39 // pred_check
          %p421 = pneg %p168
        $region58: #{tpu_custom_call.1} parent=39 // pred_check_branch
          %423 = sbr.rel (%p421) target = $region60
        $region59: #{tpu_custom_call.1} parent=39 // pred_region
          %425 = dma.done [#allocation9], 768
        $region60: #{tpu_custom_call.1} parent=39 // pred_fallthru
          _
        %s426 = sand.u32 %s55, 1
        %s427 = scalar_lea.sflag [#allocation3], %s426
        %s428 = sand.u32 %s55, 1
        %s429 = smul.addr %s428, 128
        %s430 = scalar_lea.vmem [#allocation2], %s429
        %p431 = pneg %p68
        %p432 = pneg %p65
        %s433 = sand.u32 %s26, 1
        %s434 = scalar_lea.sflag [#allocation6], %s433
        %s435 = sand.u32 %s83, 1
        %s436 = smul.addr %s435, 64
        %s437 = scalar_lea.vmem [#allocation5], %s436
        %p438 = pneg %p96
        %p439 = pneg %p93
        %s440 = sand.u32 %s26, 1
        %s441 = scalar_lea.sflag [#allocation6], %s440
        %s442 = sand.u32 %s113, 1
        %s443 = smul.addr %s442, 32
        %s444 = scalar_lea.vmem [#allocation7], %s443
        %p445 = pneg %p126
        %p446 = pneg %p123
        %p447 = pneg %p147
        %p448 = pneg %p144
        %p449 = pneg %p168
        %p450 = pneg %p165
        %p451 = pneg %p198
        %p452 = pneg %p195
        %s453 = sand.u32 %s185, 1
        %s454 = scalar_lea.sflag [#allocation4], %s453
        %s455 = sand.u32 %s185, 1
        %s456 = smul.addr %s455, 64
        %s457 = scalar_lea.vmem [#allocation11], %s456
        %s458 = smul.u32 2, %s33
        %s459 = smul.u32 2, %s33
        %s460 = smul.u32 2, %s33
        %v461 = vld [vmem:[%s390] sm:$0xff]
        %v462 = vld [vmem:[%s390 + $0x8] sm:$0xff]
        %v463 = vld [vmem:[%s390 + $0x10] sm:$0xff]
        %v464 = vld [vmem:[%s390 + $0x18] sm:$0xff]
        %v465 = vld [vmem:[%s400] sm:$0xff]
        %v466 = vld [vmem:[%s400 + $0x8] sm:$0xff]
        %v467 = vmul.f32 %v461, %v465
        %v468 = vmul.f32 %v462, %v466
        %v469 = vmul.f32 %v463, %v465
        %v470 = vmul.f32 %v464, %v466
        %s471 = scalar_lea.vmem %s390, 64 [#allocation2]
        %v472 = vld [vmem:[%s471] sm:$0xff]
        %v473 = vld [vmem:[%s471 + $0x8] sm:$0xff]
        %v474 = vld [vmem:[%s471 + $0x10] sm:$0xff]
        %v475 = vld [vmem:[%s471 + $0x18] sm:$0xff]
        %s476 = scalar_lea.vmem %s400, 32 [#allocation5]
        %v477 = vld [vmem:[%s476] sm:$0xff]
        %v478 = vld [vmem:[%s476 + $0x8] sm:$0xff]
        %v479 = vmul.f32 %v472, %v477
        %v480 = vmul.f32 %v473, %v478
        %v481 = vmul.f32 %v474, %v477
        %v482 = vmul.f32 %v475, %v478
        %v483 = vsub.f32 %v467, %v479
        %v484 = vsub.f32 %v468, %v480
        %v485 = vsub.f32 %v469, %v481
        %v486 = vsub.f32 %v470, %v482
        %v487 = vmul.f32 %v461, %v477
        %v488 = vmul.f32 %v462, %v478
        %v489 = vmul.f32 %v463, %v477
        %v490 = vmul.f32 %v464, %v478
        %v491 = vmul.f32 %v472, %v465
        %v492 = vmul.f32 %v473, %v466
        %v493 = vmul.f32 %v474, %v465
        %v494 = vmul.f32 %v475, %v466
        %v495 = vadd.f32 %v487, %v491
        %v496 = vadd.f32 %v488, %v492
        %v497 = vadd.f32 %v489, %v493
        %v498 = vadd.f32 %v490, %v494
        %s499 = scalar_lea.vmem %s390, 32 [#allocation2]
        %v500 = vld [vmem:[%s499] sm:$0xff]
        %v501 = vld [vmem:[%s499 + $0x8] sm:$0xff]
        %v502 = vld [vmem:[%s499 + $0x10] sm:$0xff]
        %v503 = vld [vmem:[%s499 + $0x18] sm:$0xff]
        %s504 = scalar_lea.vmem %s400, 16 [#allocation5]
        %v505 = vld [vmem:[%s504] sm:$0xff]
        %v506 = vld [vmem:[%s504 + $0x8] sm:$0xff]
        %v507 = vmul.f32 %v500, %v505
        %v508 = vmul.f32 %v501, %v506
        %v509 = vmul.f32 %v502, %v505
        %v510 = vmul.f32 %v503, %v506
        %v511 = vadd.f32 %v483, %v507
        %v512 = vadd.f32 %v484, %v508
        %v513 = vadd.f32 %v485, %v509
        %v514 = vadd.f32 %v486, %v510
        %s515 = scalar_lea.vmem %s390, 96 [#allocation2]
        %v516 = vld [vmem:[%s515] sm:$0xff]
        %v517 = vld [vmem:[%s515 + $0x8] sm:$0xff]
        %v518 = vld [vmem:[%s515 + $0x10] sm:$0xff]
        %v519 = vld [vmem:[%s515 + $0x18] sm:$0xff]
        %s520 = scalar_lea.vmem %s400, 48 [#allocation5]
        %v521 = vld [vmem:[%s520] sm:$0xff]
        %v522 = vld [vmem:[%s520 + $0x8] sm:$0xff]
        %v523 = vmul.f32 %v516, %v521
        %v524 = vmul.f32 %v517, %v522
        %v525 = vmul.f32 %v518, %v521
        %v526 = vmul.f32 %v519, %v522
        %v527 = vsub.f32 %v511, %v523
        %v528 = vsub.f32 %v512, %v524
        %v529 = vsub.f32 %v513, %v525
        %v530 = vsub.f32 %v514, %v526
        %v531 = vmul.f32 %v500, %v521
        %v532 = vmul.f32 %v501, %v522
        %v533 = vmul.f32 %v502, %v521
        %v534 = vmul.f32 %v503, %v522
        %v535 = vadd.f32 %v495, %v531
        %v536 = vadd.f32 %v496, %v532
        %v537 = vadd.f32 %v497, %v533
        %v538 = vadd.f32 %v498, %v534
        %v539 = vmul.f32 %v516, %v505
        %v540 = vmul.f32 %v517, %v506
        %v541 = vmul.f32 %v518, %v505
        %v542 = vmul.f32 %v519, %v506
        %v543 = vadd.f32 %v535, %v539
        %v544 = vadd.f32 %v536, %v540
        %v545 = vadd.f32 %v537, %v541
        %v546 = vadd.f32 %v538, %v542
        %v547 = vld [vmem:[#allocation10] sm:$0xff]
        %v548 = vld [vmem:[#allocation10 + $0x8] sm:$0xff]
        %s549 = scalar_lea.vmem [#allocation10], 16
        %v550 = vld [vmem:[%s549] sm:$0xff]
        %v551 = vld [vmem:[%s549 + $0x8] sm:$0xff]
        %s552 = scalar_lea.vmem [#allocation10], 32
        %v553 = vld [vmem:[%s552] sm:$0xff]
        %v554 = vld [vmem:[%s552 + $0x8] sm:$0xff]
        %v555 = vld [vmem:[#allocation8] sm:$0xff]
        %v556 = vld [vmem:[#allocation8 + $0x8] sm:$0xff]
        %s557 = scalar_lea.vmem [#allocation8], 16
        %v558 = vld [vmem:[%s557] sm:$0xff]
        %v559 = vld [vmem:[%s557 + $0x8] sm:$0xff]
        %s560 = scalar_lea.vmem [#allocation8], 32
        %v561 = vld [vmem:[%s560] sm:$0xff]
        %v562 = vld [vmem:[%s560 + $0x8] sm:$0xff]
        %v563 = vadd.f32 %v527, %v543
        %v564 = vadd.f32 %v528, %v544
        %v565 = vadd.f32 %v529, %v545
        %v566 = vadd.f32 %v530, %v546
        %vm567 = vcmask 130048
        %v569 = vsel %vm567, %v563, 0
        %v572 = vsel %vm567, %v564, 0
        %v575 = vsel %vm567, %v565, 0
        %v578 = vsel %vm567, %v566, 0
        %580 = vmatpush.msra.mxu0 0.0
        %581 = vmatpush.msra.mxu0 0.0
        %582 = vmatpush.msra.mxu0 0.0
        %583 = vmatpush.msra.mxu0 0.0
        %584 = vmatpush.msra.mxu0 0.0
        %585 = vmatpush.msra.mxu0 0.0
        %586 = vmatpush.msra.mxu0 0.0
        %587 = vmatpush.msra.mxu0 0.0
        %588 = vmatpush.msra.mxu0 0.0
        %589 = vmatpush.msra.mxu0 0.0
        %590 = vmatpush.msra.mxu0 0.0
        %591 = vmatpush.msra.mxu0 0.0
        %592 = vmatpush.msra.mxu0 0.0
        %593 = vmatpush.msra.mxu0 0.0
        %594 = vmatpush.msra.mxu0 %v548
        %595 = vmatpush.msra.mxu0 %v547
        %596 = vmatmul.f32.gmra.mxu0 %v569
        %v597 = vpop.f32.mrf.mxu0
        %v598 = vadd.f32 0.0, %v597
        %599 = vmatmul.f32.gmra.mxu0 %v572
        %v600 = vpop.f32.mrf.mxu0
        %v601 = vadd.f32 0.0, %v600
        %602 = vmatmul.f32.gmra.mxu0 %v575
        %v603 = vpop.f32.mrf.mxu0
        %v604 = vadd.f32 0.0, %v603
        %605 = vmatmul.f32.gmra.mxu0 %v578
        %v606 = vpop.f32.mrf.mxu0
        %v607 = vadd.f32 0.0, %v606
        %608 = vdwg.mxu0
        %v610 = vsel %vm567, %v527, 0
        %v613 = vsel %vm567, %v528, 0
        %v616 = vsel %vm567, %v529, 0
        %v619 = vsel %vm567, %v530, 0
        %621 = vmatpush.msra.mxu0 0.0
        %622 = vmatpush.msra.mxu0 0.0
        %623 = vmatpush.msra.mxu0 0.0
        %624 = vmatpush.msra.mxu0 0.0
        %625 = vmatpush.msra.mxu0 0.0
        %626 = vmatpush.msra.mxu0 0.0
        %627 = vmatpush.msra.mxu0 0.0
        %628 = vmatpush.msra.mxu0 0.0
        %629 = vmatpush.msra.mxu0 0.0
        %630 = vmatpush.msra.mxu0 0.0
        %631 = vmatpush.msra.mxu0 0.0
        %632 = vmatpush.msra.mxu0 0.0
        %633 = vmatpush.msra.mxu0 0.0
        %634 = vmatpush.msra.mxu0 0.0
        %635 = vmatpush.msra.mxu0 %v551
        %636 = vmatpush.msra.mxu0 %v550
        %637 = vmatmul.f32.gmra.mxu0 %v610
        %v638 = vpop.f32.mrf.mxu0
        %v639 = vadd.f32 0.0, %v638
        %640 = vmatmul.f32.gmra.mxu0 %v613
        %v641 = vpop.f32.mrf.mxu0
        %v642 = vadd.f32 0.0, %v641
        %643 = vmatmul.f32.gmra.mxu0 %v616
        %v644 = vpop.f32.mrf.mxu0
        %v645 = vadd.f32 0.0, %v644
        %646 = vmatmul.f32.gmra.mxu0 %v619
        %v647 = vpop.f32.mrf.mxu0
        %v648 = vadd.f32 0.0, %v647
        %649 = vdwg.mxu0
        %v651 = vsel %vm567, %v543, 0
        %v654 = vsel %vm567, %v544, 0
        %v657 = vsel %vm567, %v545, 0
        %v660 = vsel %vm567, %v546, 0
        %662 = vmatpush.msra.mxu0 0.0
        %663 = vmatpush.msra.mxu0 0.0
        %664 = vmatpush.msra.mxu0 0.0
        %665 = vmatpush.msra.mxu0 0.0
        %666 = vmatpush.msra.mxu0 0.0
        %667 = vmatpush.msra.mxu0 0.0
        %668 = vmatpush.msra.mxu0 0.0
        %669 = vmatpush.msra.mxu0 0.0
        %670 = vmatpush.msra.mxu0 0.0
        %671 = vmatpush.msra.mxu0 0.0
        %672 = vmatpush.msra.mxu0 0.0
        %673 = vmatpush.msra.mxu0 0.0
        %674 = vmatpush.msra.mxu0 0.0
        %675 = vmatpush.msra.mxu0 0.0
        %676 = vmatpush.msra.mxu0 %v554
        %677 = vmatpush.msra.mxu0 %v553
        %678 = vmatmul.f32.gmra.mxu0 %v651
        %v679 = vpop.f32.mrf.mxu0
        %v680 = vadd.f32 0.0, %v679
        %681 = vmatmul.f32.gmra.mxu0 %v654
        %v682 = vpop.f32.mrf.mxu0
        %v683 = vadd.f32 0.0, %v682
        %684 = vmatmul.f32.gmra.mxu0 %v657
        %v685 = vpop.f32.mrf.mxu0
        %v686 = vadd.f32 0.0, %v685
        %687 = vmatmul.f32.gmra.mxu0 %v660
        %v688 = vpop.f32.mrf.mxu0
        %v689 = vadd.f32 0.0, %v688
        %690 = vdwg.mxu0
        %v691 = vsub.f32 %v598, %v680
        %v692 = vsub.f32 %v601, %v683
        %v693 = vsub.f32 %v604, %v686
        %v694 = vsub.f32 %v607, %v689
        %v695 = vadd.f32 %v598, %v639
        %v696 = vadd.f32 %v601, %v642
        %v697 = vadd.f32 %v604, %v645
        %v698 = vadd.f32 %v607, %v648
        %v699 = vadd.f32 %v691, %v695
        %v700 = vadd.f32 %v692, %v696
        %v702 = vsel %vm567, %v555, 0
        %v705 = vsel %vm567, %v556, 0
        %707 = vmatpush.msra.mxu0 0.0
        %708 = vmatpush.msra.mxu0 0.0
        %709 = vmatpush.msra.mxu0 0.0
        %710 = vmatpush.msra.mxu0 0.0
        %711 = vmatpush.msra.mxu0 0.0
        %712 = vmatpush.msra.mxu0 0.0
        %713 = vmatpush.msra.mxu0 0.0
        %714 = vmatpush.msra.mxu0 0.0
        %715 = vmatpush.msra.mxu0 0.0
        %716 = vmatpush.msra.mxu0 0.0
        %717 = vmatpush.msra.mxu0 0.0
        %718 = vmatpush.msra.mxu0 0.0
        %719 = vmatpush.msra.mxu0 0.0
        %720 = vmatpush.msra.mxu0 0.0
        %721 = vmatpush.msra.mxu0 %v700
        %722 = vmatpush.msra.mxu0 %v699
        %723 = vmatmul.f32.gmra.mxu0 %v702
        %v724 = vpop.f32.mrf.mxu0
        %v725 = vadd.f32 0.0, %v724
        %726 = vmatmul.f32.gmra.mxu0 %v705
        %v727 = vpop.f32.mrf.mxu0
        %v728 = vadd.f32 0.0, %v727
        %729 = vdwg.mxu0
        %v731 = vsel %vm567, %v558, 0
        %v734 = vsel %vm567, %v559, 0
        %736 = vmatpush.msra.mxu0 0.0
        %737 = vmatpush.msra.mxu0 0.0
        %738 = vmatpush.msra.mxu0 0.0
        %739 = vmatpush.msra.mxu0 0.0
        %740 = vmatpush.msra.mxu0 0.0
        %741 = vmatpush.msra.mxu0 0.0
        %742 = vmatpush.msra.mxu0 0.0
        %743 = vmatpush.msra.mxu0 0.0
        %744 = vmatpush.msra.mxu0 0.0
        %745 = vmatpush.msra.mxu0 0.0
        %746 = vmatpush.msra.mxu0 0.0
        %747 = vmatpush.msra.mxu0 0.0
        %748 = vmatpush.msra.mxu0 0.0
        %749 = vmatpush.msra.mxu0 0.0
        %750 = vmatpush.msra.mxu0 %v692
        %751 = vmatpush.msra.mxu0 %v691
        %752 = vmatmul.f32.gmra.mxu0 %v731
        %v753 = vpop.f32.mrf.mxu0
        %v754 = vadd.f32 0.0, %v753
        %755 = vmatmul.f32.gmra.mxu0 %v734
        %v756 = vpop.f32.mrf.mxu0
        %v757 = vadd.f32 0.0, %v756
        %758 = vdwg.mxu0
        %v760 = vsel %vm567, %v561, 0
        %v763 = vsel %vm567, %v562, 0
        %765 = vmatpush.msra.mxu0 0.0
        %766 = vmatpush.msra.mxu0 0.0
        %767 = vmatpush.msra.mxu0 0.0
        %768 = vmatpush.msra.mxu0 0.0
        %769 = vmatpush.msra.mxu0 0.0
        %770 = vmatpush.msra.mxu0 0.0
        %771 = vmatpush.msra.mxu0 0.0
        %772 = vmatpush.msra.mxu0 0.0
        %773 = vmatpush.msra.mxu0 0.0
        %774 = vmatpush.msra.mxu0 0.0
        %775 = vmatpush.msra.mxu0 0.0
        %776 = vmatpush.msra.mxu0 0.0
        %777 = vmatpush.msra.mxu0 0.0
        %778 = vmatpush.msra.mxu0 0.0
        %779 = vmatpush.msra.mxu0 %v696
        %780 = vmatpush.msra.mxu0 %v695
        %781 = vmatmul.f32.gmra.mxu0 %v760
        %v782 = vpop.f32.mrf.mxu0
        %v783 = vadd.f32 0.0, %v782
        %784 = vmatmul.f32.gmra.mxu0 %v763
        %v785 = vpop.f32.mrf.mxu0
        %v786 = vadd.f32 0.0, %v785
        %787 = vdwg.mxu0
        %v788 = vld [vmem:[%s410] sm:$0xff]
        %v789 = vld [vmem:[%s410 + $0x8] sm:$0xff]
        %v790 = vsub.f32 %v725, %v783
        %v791 = vsub.f32 %v728, %v786
        %v792 = vmul.f32 %v788, %v790
        %v793 = vmul.f32 %v789, %v791
        %794 = vst.msk [vmem:[%s457] sm:$0xff] %vm567, %v792
        %795 = vst.msk [vmem:[%s457 + $0x8] sm:$0xff] %vm567, %v793
        %v796 = vadd.f32 %v725, %v754
        %v797 = vadd.f32 %v728, %v757
        %v798 = vmul.f32 %v788, %v796
        %v799 = vmul.f32 %v789, %v797
        %s800 = scalar_lea.vmem %s457, 32 [#allocation11]
        %801 = vst.msk [vmem:[%s800] sm:$0xff] %vm567, %v798
        %802 = vst.msk [vmem:[%s800 + $0x8] sm:$0xff] %vm567, %v799
        %v803 = vadd.f32 %v693, %v697
        %v804 = vadd.f32 %v694, %v698
        %805 = vmatpush.msra.mxu0 0.0
        %806 = vmatpush.msra.mxu0 0.0
        %807 = vmatpush.msra.mxu0 0.0
        %808 = vmatpush.msra.mxu0 0.0
        %809 = vmatpush.msra.mxu0 0.0
        %810 = vmatpush.msra.mxu0 0.0
        %811 = vmatpush.msra.mxu0 0.0
        %812 = vmatpush.msra.mxu0 0.0
        %813 = vmatpush.msra.mxu0 0.0
        %814 = vmatpush.msra.mxu0 0.0
        %815 = vmatpush.msra.mxu0 0.0
        %816 = vmatpush.msra.mxu0 0.0
        %817 = vmatpush.msra.mxu0 0.0
        %818 = vmatpush.msra.mxu0 0.0
        %819 = vmatpush.msra.mxu0 %v804
        %820 = vmatpush.msra.mxu0 %v803
        %821 = vmatmul.f32.gmra.mxu0 %v702
        %v822 = vpop.f32.mrf.mxu0
        %v823 = vadd.f32 0.0, %v822
        %824 = vmatmul.f32.gmra.mxu0 %v705
        %v825 = vpop.f32.mrf.mxu0
        %v826 = vadd.f32 0.0, %v825
        %827 = vdwg.mxu0
        %828 = vmatpush.msra.mxu0 0.0
        %829 = vmatpush.msra.mxu0 0.0
        %830 = vmatpush.msra.mxu0 0.0
        %831 = vmatpush.msra.mxu0 0.0
        %832 = vmatpush.msra.mxu0 0.0
        %833 = vmatpush.msra.mxu0 0.0
        %834 = vmatpush.msra.mxu0 0.0
        %835 = vmatpush.msra.mxu0 0.0
        %836 = vmatpush.msra.mxu0 0.0
        %837 = vmatpush.msra.mxu0 0.0
        %838 = vmatpush.msra.mxu0 0.0
        %839 = vmatpush.msra.mxu0 0.0
        %840 = vmatpush.msra.mxu0 0.0
        %841 = vmatpush.msra.mxu0 0.0
        %842 = vmatpush.msra.mxu0 %v694
        %843 = vmatpush.msra.mxu0 %v693
        %844 = vmatmul.f32.gmra.mxu0 %v731
        %v845 = vpop.f32.mrf.mxu0
        %v846 = vadd.f32 0.0, %v845
        %847 = vmatmul.f32.gmra.mxu0 %v734
        %v848 = vpop.f32.mrf.mxu0
        %v849 = vadd.f32 0.0, %v848
        %850 = vdwg.mxu0
        %851 = vmatpush.msra.mxu0 0.0
        %852 = vmatpush.msra.mxu0 0.0
        %853 = vmatpush.msra.mxu0 0.0
        %854 = vmatpush.msra.mxu0 0.0
        %855 = vmatpush.msra.mxu0 0.0
        %856 = vmatpush.msra.mxu0 0.0
        %857 = vmatpush.msra.mxu0 0.0
        %858 = vmatpush.msra.mxu0 0.0
        %859 = vmatpush.msra.mxu0 0.0
        %860 = vmatpush.msra.mxu0 0.0
        %861 = vmatpush.msra.mxu0 0.0
        %862 = vmatpush.msra.mxu0 0.0
        %863 = vmatpush.msra.mxu0 0.0
        %864 = vmatpush.msra.mxu0 0.0
        %865 = vmatpush.msra.mxu0 %v698
        %866 = vmatpush.msra.mxu0 %v697
        %867 = vmatmul.f32.gmra.mxu0 %v760
        %v868 = vpop.f32.mrf.mxu0
        %v869 = vadd.f32 0.0, %v868
        %870 = vmatmul.f32.gmra.mxu0 %v763
        %v871 = vpop.f32.mrf.mxu0
        %v872 = vadd.f32 0.0, %v871
        %873 = vdwg.mxu0
        %s874 = scalar_lea.vmem %s410, 16 [#allocation7]
        %v875 = vld [vmem:[%s874] sm:$0xff]
        %v876 = vld [vmem:[%s874 + $0x8] sm:$0xff]
        %v877 = vsub.f32 %v823, %v869
        %v878 = vsub.f32 %v826, %v872
        %v879 = vmul.f32 %v875, %v877
        %v880 = vmul.f32 %v876, %v878
        %s881 = scalar_lea.vmem %s457, 16 [#allocation11]
        %882 = vst.msk [vmem:[%s881] sm:$0xff] %vm567, %v879
        %883 = vst.msk [vmem:[%s881 + $0x8] sm:$0xff] %vm567, %v880
        %v884 = vadd.f32 %v823, %v846
        %v885 = vadd.f32 %v826, %v849
        %v886 = vmul.f32 %v875, %v884
        %v887 = vmul.f32 %v876, %v885
        %s888 = scalar_lea.vmem %s457, 48 [#allocation11]
        %889 = vst.msk [vmem:[%s888] sm:$0xff] %vm567, %v886
        %890 = vst.msk [vmem:[%s888 + $0x8] sm:$0xff] %vm567, %v887
        %s891 = sand.u32 %s185, 1
        %s892 = scalar_lea.sflag [#allocation4], %s891
        %s893 = sand.u32 %s185, 1
        %s894 = smul.addr %s893, 64
        %s895 = scalar_lea.vmem [#allocation11], %s894
        // Predicated region
        $region61: #{tpu_custom_call.1} parent=39 // pred_check
          %p896 = pneg %p195
        $region62: #{tpu_custom_call.1} parent=39 // pred_check_branch
          %898 = sbr.rel (%p896) target = $region64
        $region63: #{tpu_custom_call.1} parent=39 // pred_region
          #allocation17 [shape = 'u32[6]{0}', space=smem, size = 0x18, scoped, tag = 'DMA stride descriptor']
          %s899 = smul.u32 2, %s33
          %901 = vsyncadd %s892, 0
          %s902 = smul.addr %s899, 2
          %s903 = smul.addr %s32, 4
          %s904 = sadd.s32 %s902, %s903
          %s905 = smul.addr %s31, 16
          %s906 = sadd.s32 %s904, %s905
          %s907 = smul.addr %s906, 8
          %s908 = scalar_lea.hbm %s5, %s907
          %s910 = sshll.u32 1, 14
          %s911 = sxor.u32 4294967295, %s910
          %s914 = sshll.u32 7, 18
          %s915 = sxor.u32 4294967295, %s914
          %s916 = sand.u32 0, %s915
          %s918 = sor.u32 %s916, 0
          %s919 = sshll.u32 %s895, 4
          %s920 = int_to_ptr.vmem [resolvable:$true] %s919
          %s921 = sshll.u32 %s908, 4
          %s922 = int_to_ptr.hbm [resolvable:$true] %s921
          %928 = sst [smem:[#allocation17]] 512
          %s929 = scalar_lea.smem [#allocation17], 1
          %930 = sst [smem:[%s929]] 4096
          %s931 = scalar_lea.smem [#allocation17], 2
          %932 = sst [smem:[%s931]] 4
          %s933 = scalar_lea.smem [#allocation17], 3
          %934 = sst [smem:[%s933]] 128
          %s935 = scalar_lea.smem [#allocation17], 4
          %936 = sst [smem:[%s935]] 128
          %s937 = scalar_lea.smem [#allocation17], 5
          %938 = sst [smem:[%s937]] 8
          %940 = dma.general %s920, 1024, %s922, %s892, [#allocation16], [#allocation17], %s918, 0
        $region64: #{tpu_custom_call.1} parent=39 // pred_fallthru
          _
      $region40: #{tpu_custom_call.1} parent=5 // pred_fallthru
        _
      %p941 = scmp.le.s32.totalorder 2, %s21
      // Predicated region
      $region65: #{tpu_custom_call.1} parent=5 // pred_check
        %p942 = pneg %p941
      $region66: #{tpu_custom_call.1} parent=5 // pred_check_branch
        %944 = sbr.rel (%p942) target = $region68
      $region67: #{tpu_custom_call.1} parent=5 // pred_region
        %s945 = ssub.s32 %s21, 2
        // Predicated region
        $region69: #{tpu_custom_call.1} parent=67 // pred_check
          %p946 = pneg %p201
        $region70: #{tpu_custom_call.1} parent=67 // pred_check_branch
          %948 = sbr.rel (%p946) target = $region72
        $region71: #{tpu_custom_call.1} parent=67 // pred_region
          %s949 = sand.u32 %s186, 1
          %s950 = scalar_lea.sflag [#allocation4], %s949
          %s951 = sand.u32 %s186, 1
          %s952 = smul.addr %s951, 64
          %s953 = scalar_lea.vmem [#allocation11], %s952
          %955 = dma.done %s950, 1024
        $region72: #{tpu_custom_call.1} parent=67 // pred_fallthru
          _
      $region68: #{tpu_custom_call.1} parent=5 // pred_fallthru
        _
    $region6: #{tpu_custom_call.1} parent=1 // loop_footer
      %s25 = sadd.s32 1, %s21
    $region7: #{tpu_custom_call.1} parent=1 // loop_footer_branch
      %20 = sbr.rel target = $region3
    $region8: #{tpu_custom_call.1} parent=1 // loop_exit
      _
    %956 = vsyncpa [#allocation3], 1
    %s957 = scalar_lea.sflag [#allocation3], 1
    %958 = vsyncpa %s957, 1
    %959 = vsyncpa [#allocation6], 1
    %s960 = scalar_lea.sflag [#allocation6], 1
    %961 = vsyncpa %s960, 1
    %962 = vsyncpa [#allocation9], 1
    %963 = vsyncpa [#allocation4], 1
    %s964 = scalar_lea.sflag [#allocation4], 1
    %965 = vsyncpa %s964, 1

</llo_original>
